<compile_context>
chip_gen: v5e
topology: v5e:2x2
jax: 0.10.0
libtpu: 0.0.40
codegen_flags: <defaults>
</compile_context>

<pallas_src>
import functools
import math

import jax
import jax.numpy as jnp
from jax.experimental import pallas as pl
from jax.experimental.pallas import tpu as pltpu


def _critic_kernel(state_ref, action_ref, w1s_ref, w1a_ref, b1_ref,
                   w2_ref, b2_ref, w3_ref, b3_ref, o_ref, *, compute_dtype):
    s = state_ref[...].astype(compute_dtype)
    a = action_ref[...].astype(compute_dtype)

    # fc1: concat fused as a split-weight matmul, f32 accumulation on the MXU.
    h1 = jnp.dot(s, w1s_ref[...].astype(compute_dtype),
                 preferred_element_type=jnp.float32)
    h1 = h1 + jnp.dot(a, w1a_ref[...].astype(compute_dtype),
                      preferred_element_type=jnp.float32)
    h1 = jnp.maximum(h1 + b1_ref[...], 0.0)          # bias + ReLU in f32 (VPU)

    # fc2: (TB, H) x (H, H) -- the only FLOP-heavy matmul in the network.
    h2 = jnp.dot(h1.astype(compute_dtype), w2_ref[...].astype(compute_dtype),
                 preferred_element_type=jnp.float32)
    h2 = jnp.maximum(h2 + b2_ref[...], 0.0)

    # fc3: VPU multiply + lane reduction (XLU) instead of a 1-column MXU matmul.
    q = jnp.sum(h2 * w3_ref[...], axis=-1, keepdims=True) + b3_ref[0, 0]
    o_ref[...] = q.astype(o_ref.dtype)


def critic_forward(state, action, params, *, compute_dtype=jnp.float32):
    """state: (B, state_dim), action: (B, action_dim) -> q: (B, 1)."""
    w1_s, w1_a, b1, w2, b2, w3, b3 = params
    B, state_dim = state.shape
    action_dim = action.shape[1]
    H = w2.shape[0]

    # Batch tile: whole batch for small B (single grid step); 512 for large B
    # (multiple of 256 = v6e/v7x MXU native M, multiple of 128 for v5e).
    # Per-step VMEM (tiles + resident weights, double-buffered) is ~1 MiB,
    # well under v7x's 32 MiB scoped-VMEM default regardless of B.
    TB = B if B <= 512 else 512
    grid = (pl.cdiv(B, TB),)

    def resident(shape):
        # Constant block index -> weights/biases stay in VMEM across the grid.
        return pl.BlockSpec(shape, lambda i: (0, 0))

    in_dim = state_dim + action_dim
    flops = 2 * B * (in_dim * H + H * H + H)
    bytes_accessed = 4 * (B * (in_dim + 1) + in_dim * H + H * H + 3 * H + 1)

    return pl.pallas_call(
        functools.partial(_critic_kernel, compute_dtype=compute_dtype),
        out_shape=jax.ShapeDtypeStruct((B, 1), jnp.float32),
        grid=grid,
        in_specs=[
            pl.BlockSpec((TB, state_dim), lambda i: (i, 0)),    # state tile
            pl.BlockSpec((TB, action_dim), lambda i: (i, 0)),   # action tile
            resident((state_dim, H)),                           # fc1 weight (state rows)
            resident((action_dim, H)),                          # fc1 weight (action rows)
            resident((1, H)),                                   # b1
            resident((H, H)),                                   # fc2 weight
            resident((1, H)),                                   # b2
            resident((1, H)),                                   # fc3 weight as a row
            pl.BlockSpec(memory_space=pltpu.MemorySpace.SMEM),  # b3 scalar in SMEM
        ],
        out_specs=pl.BlockSpec((TB, 1), lambda i: (i, 0)),
        compiler_params=pltpu.CompilerParams(
            dimension_semantics=("parallel",)),                 # v7x megacore
        cost_estimate=pl.CostEstimate(flops=flops, transcendentals=0,
                                      bytes_accessed=bytes_accessed),
    )(state, action, w1_s, w1_a, b1, w2, b2, w3, b3)


def xavier_uniform(key, fan_in, fan_out, dtype=jnp.float32):
    # Matches torch.nn.init.xavier_uniform_ bounds (gain=1).
    bound = math.sqrt(6.0 / (fan_in + fan_out))
    # PyTorch weight is (out, in); we store transposed (in, out) for x @ W.
    return jax.random.uniform(key, (fan_in, fan_out), dtype=dtype,
                              minval=-bound, maxval=bound)


def init_critic_params(key, state_dim, action_dim, hidden_size=256):
    k1, k2, k3 = jax.random.split(key, 3)
    in_dim = state_dim + action_dim
    w1 = xavier_uniform(k1, in_dim, hidden_size)     # bound uses full fan_in (matches torch)
    w1_s, w1_a = w1[:state_dim], w1[state_dim:]      # split once: concat fused in kernel
    b1 = jnp.zeros((1, hidden_size), jnp.float32)
    w2 = xavier_uniform(k2, hidden_size, hidden_size)
    b2 = jnp.zeros((1, hidden_size), jnp.float32)
    # fc3 weight kept as a (1, H) row for the in-kernel lane-reduce.
    w3 = xavier_uniform(k3, hidden_size, 1).reshape(1, hidden_size)
    b3 = jnp.zeros((1, 1), jnp.float32)
    return (w1_s, w1_a, b1, w2, b2, w3, b3)


if __name__ == "__main__":
    key = jax.random.PRNGKey(0)
    kp, ks, ka = jax.random.split(key, 3)

    batch, state_dim, action_dim, hidden = 8, 16, 8, 256
    params = init_critic_params(kp, state_dim, action_dim, hidden)
    state = jax.random.normal(ks, (batch, state_dim), jnp.float32)
    action = jax.random.normal(ka, (batch, action_dim), jnp.float32)

    q = critic_forward(state, action, params)
    jax.block_until_ready(q)

    # Pure-JAX reference of the original PyTorch math.
    w1_s, w1_a, b1, w2, b2, w3, b3 = params
    x = jnp.concatenate([state, action], axis=1)
    w1 = jnp.concatenate([w1_s, w1_a], axis=0)
    ref = jnp.maximum(x @ w1 + b1, 0.0)
    ref = jnp.maximum(ref @ w2 + b2, 0.0)
    ref = ref @ w3.T + b3

    assert q.shape == (batch, 1)
    assert jnp.allclose(q, ref, atol=1e-5, rtol=1e-5)

    print("KERNEL_OK")
</pallas_src>

<mosaic_0001>
module attributes {stable_mosaic.version = 11 : i64} {
  func.func @_critic_kernel(%arg0: i32, %arg1: memref<8x16xf32, #tpu.memory_space<vmem>>, %arg2: memref<8x8xf32, #tpu.memory_space<vmem>>, %arg3: memref<16x256xf32, #tpu.memory_space<vmem>>, %arg4: memref<8x256xf32, #tpu.memory_space<vmem>>, %arg5: memref<1x256xf32, #tpu.memory_space<vmem>>, %arg6: memref<256x256xf32, #tpu.memory_space<vmem>>, %arg7: memref<1x256xf32, #tpu.memory_space<vmem>>, %arg8: memref<1x256xf32, #tpu.memory_space<vmem>>, %arg9: memref<1x1xf32, #tpu.memory_space<smem>>, %arg10: memref<8x1xf32, #tpu.memory_space<vmem>>) attributes {dimension_semantics = [#tpu.dimension_semantics<parallel>], iteration_bounds = array<i64: 1>, scalar_prefetch = 0 : i64, scratch_operands = 0 : i64, tpu.core_type = #tpu.core_type<tc>, window_params = [{transform_indices = @transform_0, window_bounds = array<i64: 8, 16>}, {transform_indices = @transform_1, window_bounds = array<i64: 8, 8>}, {pipeline_mode = #tpu.pipeline_mode<synchronous>, transform_indices = @transform_2, window_bounds = array<i64: 16, 256>}, {pipeline_mode = #tpu.pipeline_mode<synchronous>, transform_indices = @transform_3, window_bounds = array<i64: 8, 256>}, {pipeline_mode = #tpu.pipeline_mode<synchronous>, transform_indices = @transform_4, window_bounds = array<i64: 1, 256>}, {pipeline_mode = #tpu.pipeline_mode<synchronous>, transform_indices = @transform_5, window_bounds = array<i64: 256, 256>}, {pipeline_mode = #tpu.pipeline_mode<synchronous>, transform_indices = @transform_6, window_bounds = array<i64: 1, 256>}, {pipeline_mode = #tpu.pipeline_mode<synchronous>, transform_indices = @transform_7, window_bounds = array<i64: 1, 256>}, {transform_indices = @transform_8, window_bounds = array<i64: 1, 1>}, {transform_indices = @transform_9, window_bounds = array<i64: 8, 1>}]} {
    %c0 = arith.constant 0 : index
    %c0_0 = arith.constant 0 : index
    %0 = vector.load %arg1[%c0, %c0_0] : memref<8x16xf32, #tpu.memory_space<vmem>>, vector<8x16xf32>
    %c0_1 = arith.constant 0 : index
    %c0_2 = arith.constant 0 : index
    %1 = vector.load %arg2[%c0_1, %c0_2] : memref<8x8xf32, #tpu.memory_space<vmem>>, vector<8x8xf32>
    %c0_3 = arith.constant 0 : index
    %c0_4 = arith.constant 0 : index
    %2 = vector.load %arg3[%c0_3, %c0_4] : memref<16x256xf32, #tpu.memory_space<vmem>>, vector<16x256xf32>
    %cst = arith.constant dense<0.000000e+00> : vector<8x256xf32>
    %3 = tpu.matmul %0, %2, %cst {dimension_numbers = #tpu.dot_dimension_numbers<[1], [0], [0], [1], [0, 0, 1, 1], [], []>} : vector<8x16xf32>, vector<16x256xf32>, vector<8x256xf32> -> vector<8x256xf32>
    %c0_5 = arith.constant 0 : index
    %c0_6 = arith.constant 0 : index
    %4 = vector.load %arg4[%c0_5, %c0_6] : memref<8x256xf32, #tpu.memory_space<vmem>>, vector<8x256xf32>
    %cst_7 = arith.constant dense<0.000000e+00> : vector<8x256xf32>
    %5 = tpu.matmul %1, %4, %cst_7 {dimension_numbers = #tpu.dot_dimension_numbers<[1], [0], [0], [1], [0, 0, 1, 1], [], []>} : vector<8x8xf32>, vector<8x256xf32>, vector<8x256xf32> -> vector<8x256xf32>
    %6 = arith.addf %3, %5 : vector<8x256xf32>
    %c0_8 = arith.constant 0 : index
    %c0_9 = arith.constant 0 : index
    %7 = vector.load %arg5[%c0_8, %c0_9] : memref<1x256xf32, #tpu.memory_space<vmem>>, vector<1x256xf32>
    %8 = vector.broadcast %7 : vector<1x256xf32> to vector<8x256xf32>
    %9 = arith.addf %6, %8 : vector<8x256xf32>
    %cst_10 = arith.constant 0.000000e+00 : f32
    %10 = vector.broadcast %cst_10 : f32 to vector<8x256xf32>
    %11 = arith.maximumf %9, %10 : vector<8x256xf32>
    %c0_11 = arith.constant 0 : index
    %c0_12 = arith.constant 0 : index
    %12 = vector.load %arg6[%c0_11, %c0_12] : memref<256x256xf32, #tpu.memory_space<vmem>>, vector<256x256xf32>
    %cst_13 = arith.constant dense<0.000000e+00> : vector<8x256xf32>
    %13 = tpu.matmul %11, %12, %cst_13 {dimension_numbers = #tpu.dot_dimension_numbers<[1], [0], [0], [1], [0, 0, 1, 1], [], []>} : vector<8x256xf32>, vector<256x256xf32>, vector<8x256xf32> -> vector<8x256xf32>
    %c0_14 = arith.constant 0 : index
    %c0_15 = arith.constant 0 : index
    %14 = vector.load %arg7[%c0_14, %c0_15] : memref<1x256xf32, #tpu.memory_space<vmem>>, vector<1x256xf32>
    %15 = vector.broadcast %14 : vector<1x256xf32> to vector<8x256xf32>
    %16 = arith.addf %13, %15 : vector<8x256xf32>
    %cst_16 = arith.constant 0.000000e+00 : f32
    %17 = vector.broadcast %cst_16 : f32 to vector<8x256xf32>
    %18 = arith.maximumf %16, %17 : vector<8x256xf32>
    %c0_17 = arith.constant 0 : index
    %c0_18 = arith.constant 0 : index
    %19 = vector.load %arg8[%c0_17, %c0_18] : memref<1x256xf32, #tpu.memory_space<vmem>>, vector<1x256xf32>
    %20 = vector.broadcast %19 : vector<1x256xf32> to vector<8x256xf32>
    %21 = arith.mulf %18, %20 : vector<8x256xf32>
    %cst_19 = arith.constant dense<0.000000e+00> : vector<8xf32>
    %22 = vector.multi_reduction <add>, %21, %cst_19 [1] : vector<8x256xf32> to vector<8xf32>
    %23 = vector.shape_cast %22 : vector<8xf32> to vector<8x1xf32>
    %c0_20 = arith.constant 0 : index
    %c0_21 = arith.constant 0 : index
    %24 = memref.load %arg9[%c0_20, %c0_21] : memref<1x1xf32, #tpu.memory_space<smem>>
    %25 = vector.broadcast %24 : f32 to vector<8x1xf32>
    %26 = arith.addf %23, %25 : vector<8x1xf32>
    %c0_22 = arith.constant 0 : index
    %c0_23 = arith.constant 0 : index
    %27 = vector.load %arg10[%c0_22, %c0_23] : memref<8x1xf32, #tpu.memory_space<vmem>>, vector<8x1xf32>
    tpu.vector_store %arg10[%c0_22, %c0_23], %26 {strides = array<i32>} : memref<8x1xf32, #tpu.memory_space<vmem>>, vector<8x1xf32>,
    return
  }
  func.func @transform_0(%arg0: i32) -> (i32, i32) {
    %c0_i32 = arith.constant 0 : i32
    %c0_i32_0 = arith.constant 0 : i32
    return %arg0, %c0_i32 : i32, i32
  }
  func.func @transform_1(%arg0: i32) -> (i32, i32) {
    %c0_i32 = arith.constant 0 : i32
    %c0_i32_0 = arith.constant 0 : i32
    return %arg0, %c0_i32 : i32, i32
  }
  func.func @transform_2(%arg0: i32) -> (i32, i32) {
    %c0_i32 = arith.constant 0 : i32
    %c0_i32_0 = arith.constant 0 : i32
    %c0_i32_1 = arith.constant 0 : i32
    return %c0_i32, %c0_i32_0 : i32, i32
  }
  func.func @transform_3(%arg0: i32) -> (i32, i32) {
    %c0_i32 = arith.constant 0 : i32
    %c0_i32_0 = arith.constant 0 : i32
    %c0_i32_1 = arith.constant 0 : i32
    return %c0_i32, %c0_i32_0 : i32, i32
  }
  func.func @transform_4(%arg0: i32) -> (i32, i32) {
    %c0_i32 = arith.constant 0 : i32
    %c0_i32_0 = arith.constant 0 : i32
    %c0_i32_1 = arith.constant 0 : i32
    return %c0_i32, %c0_i32_0 : i32, i32
  }
  func.func @transform_5(%arg0: i32) -> (i32, i32) {
    %c0_i32 = arith.constant 0 : i32
    %c0_i32_0 = arith.constant 0 : i32
    %c0_i32_1 = arith.constant 0 : i32
    return %c0_i32, %c0_i32_0 : i32, i32
  }
  func.func @transform_6(%arg0: i32) -> (i32, i32) {
    %c0_i32 = arith.constant 0 : i32
    %c0_i32_0 = arith.constant 0 : i32
    %c0_i32_1 = arith.constant 0 : i32
    return %c0_i32, %c0_i32_0 : i32, i32
  }
  func.func @transform_7(%arg0: i32) -> (i32, i32) {
    %c0_i32 = arith.constant 0 : i32
    %c0_i32_0 = arith.constant 0 : i32
    %c0_i32_1 = arith.constant 0 : i32
    return %c0_i32, %c0_i32_0 : i32, i32
  }
  func.func @transform_8(%arg0: i32) -> (i32, i32) {
    %c0_i32 = arith.constant 0 : i32
    %c0_i32_0 = arith.constant 0 : i32
    %c0_i32_1 = arith.constant 0 : i32
    return %c0_i32, %c0_i32_0 : i32, i32
  }
  func.func @transform_9(%arg0: i32) -> (i32, i32) {
    %c0_i32 = arith.constant 0 : i32
    %c0_i32_0 = arith.constant 0 : i32
    return %arg0, %c0_i32 : i32, i32
  }
}

</mosaic_0001>

<llo_original>
// kernel: tpu_custom_call.1
$region0: #{tpu_custom_call.1}
  #allocation0 [shape = 'u32[]', space=smem, size = 0x4, offset = 0x4, fixed_abs, tag = 'smem constant byte address 0x4 - core index']
  #allocation1 [shape = 'u32[72,128]{1,0:T(1,128)}', space=vmem, size = 0x9000, scoped, tag = 'internal scratch']
  #allocation2 [shape = 'f32[1,1]{1,0:T(1,128)S(6)}', space=smem, size = 0x200, scoped, tag = 'scoped memory for tpu_custom_call.1']
  %s0 = inlined_call_operand.hbm [shape: f32[8,16], index: 0, kind: input, shape index: {}]
  %s1 = inlined_call_operand.hbm [shape: f32[8,8], index: 1, kind: input, shape index: {}]
  %s2 = inlined_call_operand.hbm [shape: f32[16,256], index: 2, kind: input, shape index: {}]
  %s3 = inlined_call_operand.hbm [shape: f32[8,256], index: 3, kind: input, shape index: {}]
  %s4 = inlined_call_operand.vmem [shape: f32[1,256], index: 4, kind: input, shape index: {}]
  %s5 = inlined_call_operand.hbm [shape: f32[256,256], index: 5, kind: input, shape index: {}]
  %s6 = inlined_call_operand.vmem [shape: f32[1,256], index: 6, kind: input, shape index: {}]
  %s7 = inlined_call_operand.vmem [shape: f32[1,256], index: 7, kind: input, shape index: {}]
  %s8 = inlined_call_operand.<no memory space> [shape: f32[1,1], index: 8, kind: input, shape index: {}]
  %s9 = inlined_call_operand.vmem [shape: f32[8,1], index: 9, kind: output, shape index: {}]
  %s10 = sld [smem:[#allocation0]]
  $region66: #{tpu_custom_call.1} parent=0
    _
  %s12 = ssub.s32 1, %s10
  %s13 = scalar_select 0, %s12, %s10
  %14 = sst [smem:[#allocation2]] %s8
  $region1: #{tpu_custom_call.1} parent=0
    #allocation3 [shape = 'u8[4096]{0}', space=vmem, size = 0x1000, scoped, tag = 'input window, operand 0, single buffered']
    #allocation4 [shape = 's32[1]{0}', space=sflag, size = 0x4, scoped, tag = 'scoped memory for tpu_custom_call.1']
    #allocation5 [shape = 'u8[4096]{0}', space=vmem, size = 0x1000, scoped, tag = 'input window, operand 1, single buffered']
    #allocation6 [shape = 's32[1]{0}', space=sflag, size = 0x4, scoped, tag = 'scoped memory for tpu_custom_call.1']
    #allocation7 [shape = 'u8[16384]{0}', space=vmem, size = 0x4000, scoped, tag = 'input window, operand 2, single buffered']
    #allocation8 [shape = 'u8[8192]{0}', space=vmem, size = 0x2000, scoped, tag = 'input window, operand 3, single buffered']
    #allocation9 [shape = 's32[1]{0}', space=sflag, size = 0x4, scoped, tag = 'scoped memory for tpu_custom_call.1']
    #allocation10 [shape = 'u8[262144]{0}', space=vmem, size = 0x40000, scoped, tag = 'input window, operand 5, single buffered']
    %15 = vsyncpa [#allocation4], 0
    %16 = vsyncpa [#allocation6], 0
    %17 = vsyncpa [#allocation9], 0
    // Predicated region
    $region2: #{tpu_custom_call.1} parent=1 // pred_check
      _
    $region3: #{tpu_custom_call.1} parent=1 // pred_check_branch
      %19 = sbr.rel (0) target = $region5
    $region4: #{tpu_custom_call.1} parent=1 // pred_region
      %21 = vsyncadd [#allocation4], 0
      %s23 = sshll.u32 %s0, 4
      %s24 = int_to_ptr.hbm [resolvable:$true] %s23
      %s25 = sshll.u32 [#allocation3], 4
      %s26 = int_to_ptr.vmem [resolvable:$true] %s25
      %28 = dma.hbm_to_vmem [thread:$0]  %s24, 128, %s26, [#allocation4]
    $region5: #{tpu_custom_call.1} parent=1 // pred_fallthru
      _
    // Predicated region
    $region6: #{tpu_custom_call.1} parent=1 // pred_check
      _
    $region7: #{tpu_custom_call.1} parent=1 // pred_check_branch
      %30 = sbr.rel (0) target = $region9
    $region8: #{tpu_custom_call.1} parent=1 // pred_region
      %32 = vsyncadd [#allocation6], 0
      %s34 = sshll.u32 %s1, 4
      %s35 = int_to_ptr.hbm [resolvable:$true] %s34
      %s36 = sshll.u32 [#allocation5], 4
      %s37 = int_to_ptr.vmem [resolvable:$true] %s36
      %39 = dma.hbm_to_vmem [thread:$0]  %s35, 128, %s37, [#allocation6]
    $region9: #{tpu_custom_call.1} parent=1 // pred_fallthru
      _
    // Predicated region
    $region10: #{tpu_custom_call.1} parent=1 // pred_check
      _
    $region11: #{tpu_custom_call.1} parent=1 // pred_check_branch
      %41 = sbr.rel (0) target = $region13
    $region12: #{tpu_custom_call.1} parent=1 // pred_region
      %43 = vsyncadd [#allocation6], 0
      %s44 = sshll.u32 %s2, 4
      %s45 = int_to_ptr.hbm [resolvable:$true] %s44
      %s46 = sshll.u32 [#allocation7], 4
      %s47 = int_to_ptr.vmem [resolvable:$true] %s46
      %52 = dma.hbm_to_vmem [thread:$0]  %s45, 512, %s47, [#allocation6], 256, 256, 16
    $region13: #{tpu_custom_call.1} parent=1 // pred_fallthru
      _
    // Predicated region
    $region14: #{tpu_custom_call.1} parent=1 // pred_check
      _
    $region15: #{tpu_custom_call.1} parent=1 // pred_check_branch
      %54 = sbr.rel (0) target = $region17
    $region16: #{tpu_custom_call.1} parent=1 // pred_region
      %56 = vsyncadd [#allocation9], 0
      %s58 = sshll.u32 %s3, 4
      %s59 = int_to_ptr.hbm [resolvable:$true] %s58
      %s60 = sshll.u32 [#allocation8], 4
      %s61 = int_to_ptr.vmem [resolvable:$true] %s60
      %63 = dma.hbm_to_vmem [thread:$0]  %s59, 256, %s61, [#allocation9]
    $region17: #{tpu_custom_call.1} parent=1 // pred_fallthru
      _
    // Predicated region
    $region18: #{tpu_custom_call.1} parent=1 // pred_check
      _
    $region19: #{tpu_custom_call.1} parent=1 // pred_check_branch
      %65 = sbr.rel (0) target = $region21
    $region20: #{tpu_custom_call.1} parent=1 // pred_region
      _
    $region21: #{tpu_custom_call.1} parent=1 // pred_fallthru
      _
    // Predicated region
    $region22: #{tpu_custom_call.1} parent=1 // pred_check
      _
    $region23: #{tpu_custom_call.1} parent=1 // pred_check_branch
      %67 = sbr.rel (0) target = $region25
    $region24: #{tpu_custom_call.1} parent=1 // pred_region
      %69 = vsyncadd [#allocation9], 0
      %s70 = sshll.u32 %s5, 4
      %s71 = int_to_ptr.hbm [resolvable:$true] %s70
      %s72 = sshll.u32 [#allocation10], 4
      %s73 = int_to_ptr.vmem [resolvable:$true] %s72
      %78 = dma.hbm_to_vmem [thread:$0]  %s71, 8192, %s73, [#allocation9], 256, 256, 16
    $region25: #{tpu_custom_call.1} parent=1 // pred_fallthru
      _
    // Predicated region
    $region26: #{tpu_custom_call.1} parent=1 // pred_check
      _
    $region27: #{tpu_custom_call.1} parent=1 // pred_check_branch
      %80 = sbr.rel (0) target = $region29
    $region28: #{tpu_custom_call.1} parent=1 // pred_region
      _
    $region29: #{tpu_custom_call.1} parent=1 // pred_fallthru
      _
    // Predicated region
    $region30: #{tpu_custom_call.1} parent=1 // pred_check
      _
    $region31: #{tpu_custom_call.1} parent=1 // pred_check_branch
      %82 = sbr.rel (0) target = $region33
    $region32: #{tpu_custom_call.1} parent=1 // pred_region
      _
    $region33: #{tpu_custom_call.1} parent=1 // pred_fallthru
      _
    // Predicated region
    $region34: #{tpu_custom_call.1} parent=1 // pred_check
      _
    $region35: #{tpu_custom_call.1} parent=1 // pred_check_branch
      %84 = sbr.rel (0) target = $region37
    $region36: #{tpu_custom_call.1} parent=1 // pred_region
      _
    $region37: #{tpu_custom_call.1} parent=1 // pred_fallthru
      _
    // Predicated region
    $region38: #{tpu_custom_call.1} parent=1 // pred_check
      _
    $region39: #{tpu_custom_call.1} parent=1 // pred_check_branch
      %86 = sbr.rel (0) target = $region41
    $region40: #{tpu_custom_call.1} parent=1 // pred_region
      %88 = dma.done [#allocation4], 128
    $region41: #{tpu_custom_call.1} parent=1 // pred_fallthru
      _
    // Predicated region
    $region42: #{tpu_custom_call.1} parent=1 // pred_check
      _
    $region43: #{tpu_custom_call.1} parent=1 // pred_check_branch
      %90 = sbr.rel (0) target = $region45
    $region44: #{tpu_custom_call.1} parent=1 // pred_region
      %92 = dma.done [#allocation6], 128
    $region45: #{tpu_custom_call.1} parent=1 // pred_fallthru
      _
    // Predicated region
    $region46: #{tpu_custom_call.1} parent=1 // pred_check
      _
    $region47: #{tpu_custom_call.1} parent=1 // pred_check_branch
      %94 = sbr.rel (0) target = $region49
    $region48: #{tpu_custom_call.1} parent=1 // pred_region
      %96 = dma.done [#allocation6], 512
    $region49: #{tpu_custom_call.1} parent=1 // pred_fallthru
      _
    // Predicated region
    $region50: #{tpu_custom_call.1} parent=1 // pred_check
      _
    $region51: #{tpu_custom_call.1} parent=1 // pred_check_branch
      %98 = sbr.rel (0) target = $region53
    $region52: #{tpu_custom_call.1} parent=1 // pred_region
      %100 = dma.done [#allocation9], 256
    $region53: #{tpu_custom_call.1} parent=1 // pred_fallthru
      _
    // Predicated region
    $region54: #{tpu_custom_call.1} parent=1 // pred_check
      _
    $region55: #{tpu_custom_call.1} parent=1 // pred_check_branch
      %102 = sbr.rel (0) target = $region57
    $region56: #{tpu_custom_call.1} parent=1 // pred_region
      %104 = dma.done [#allocation9], 8192
    $region57: #{tpu_custom_call.1} parent=1 // pred_fallthru
      _
    %v105 = vld [vmem:[#allocation3] sm:$0xff]
    %v106 = vld [vmem:[#allocation5] sm:$0xff]
    %v107 = vld [vmem:[#allocation7] sm:$0xff]
    %v108 = vld [vmem:[#allocation7 + $0x8] sm:$0xff]
    %v109 = vld [vmem:[#allocation7 + $0x10] sm:$0xff]
    %v110 = vld [vmem:[#allocation7 + $0x18] sm:$0xff]
    %v111 = vld [vmem:[#allocation8] sm:$0xff]
    %v112 = vld [vmem:[#allocation8 + $0x8] sm:$0xff]
    %vm113 = vcmask 64512
    %v115 = vsel %vm113, %v106, 0
    %117 = vmatpush.msra.mxu0 0.0
    %118 = vmatpush.msra.mxu0 0.0
    %119 = vmatpush.msra.mxu0 0.0
    %120 = vmatpush.msra.mxu0 0.0
    %121 = vmatpush.msra.mxu0 0.0
    %122 = vmatpush.msra.mxu0 0.0
    %123 = vmatpush.msra.mxu0 0.0
    %124 = vmatpush.msra.mxu0 0.0
    %125 = vmatpush.msra.mxu0 0.0
    %126 = vmatpush.msra.mxu0 0.0
    %127 = vmatpush.msra.mxu0 0.0
    %128 = vmatpush.msra.mxu0 0.0
    %129 = vmatpush.msra.mxu0 0.0
    %130 = vmatpush.msra.mxu0 0.0
    %131 = vmatpush.msra.mxu0 0.0
    %132 = vmatpush.msra.mxu0 %v111
    %133 = vmatmul.f32.gmra.mxu0 %v115
    %v134 = vpop.f32.mrf.mxu0
    %v135 = vadd.f32 0.0, %v134
    %136 = vdwg.mxu0
    %137 = vmatpush.msra.mxu0 0.0
    %138 = vmatpush.msra.mxu0 0.0
    %139 = vmatpush.msra.mxu0 0.0
    %140 = vmatpush.msra.mxu0 0.0
    %141 = vmatpush.msra.mxu0 0.0
    %142 = vmatpush.msra.mxu0 0.0
    %143 = vmatpush.msra.mxu0 0.0
    %144 = vmatpush.msra.mxu0 0.0
    %145 = vmatpush.msra.mxu0 0.0
    %146 = vmatpush.msra.mxu0 0.0
    %147 = vmatpush.msra.mxu0 0.0
    %148 = vmatpush.msra.mxu0 0.0
    %149 = vmatpush.msra.mxu0 0.0
    %150 = vmatpush.msra.mxu0 0.0
    %151 = vmatpush.msra.mxu0 0.0
    %152 = vmatpush.msra.mxu0 %v112
    %153 = vmatmul.f32.gmra.mxu0 %v115
    %v154 = vpop.f32.mrf.mxu0
    %v155 = vadd.f32 0.0, %v154
    %156 = vdwg.mxu0
    %vm157 = vcmask 130048
    %v159 = vsel %vm157, %v105, 0
    %161 = vmatpush.msra.mxu0 0.0
    %162 = vmatpush.msra.mxu0 0.0
    %163 = vmatpush.msra.mxu0 0.0
    %164 = vmatpush.msra.mxu0 0.0
    %165 = vmatpush.msra.mxu0 0.0
    %166 = vmatpush.msra.mxu0 0.0
    %167 = vmatpush.msra.mxu0 0.0
    %168 = vmatpush.msra.mxu0 0.0
    %169 = vmatpush.msra.mxu0 0.0
    %170 = vmatpush.msra.mxu0 0.0
    %171 = vmatpush.msra.mxu0 0.0
    %172 = vmatpush.msra.mxu0 0.0
    %173 = vmatpush.msra.mxu0 0.0
    %174 = vmatpush.msra.mxu0 0.0
    %175 = vmatpush.msra.mxu0 %v109
    %176 = vmatpush.msra.mxu0 %v107
    %177 = vmatmul.f32.gmra.mxu0 %v159
    %v178 = vpop.f32.mrf.mxu0
    %v179 = vadd.f32 %v135, %v178
    %180 = vdwg.mxu0
    %181 = vmatpush.msra.mxu0 0.0
    %182 = vmatpush.msra.mxu0 0.0
    %183 = vmatpush.msra.mxu0 0.0
    %184 = vmatpush.msra.mxu0 0.0
    %185 = vmatpush.msra.mxu0 0.0
    %186 = vmatpush.msra.mxu0 0.0
    %187 = vmatpush.msra.mxu0 0.0
    %188 = vmatpush.msra.mxu0 0.0
    %189 = vmatpush.msra.mxu0 0.0
    %190 = vmatpush.msra.mxu0 0.0
    %191 = vmatpush.msra.mxu0 0.0
    %192 = vmatpush.msra.mxu0 0.0
    %193 = vmatpush.msra.mxu0 0.0
    %194 = vmatpush.msra.mxu0 0.0
    %195 = vmatpush.msra.mxu0 %v110
    %196 = vmatpush.msra.mxu0 %v108
    %197 = vmatmul.f32.gmra.mxu0 %v159
    %v198 = vpop.f32.mrf.mxu0
    %v199 = vadd.f32 %v155, %v198
    %200 = vdwg.mxu0
    %v201 = vld [vmem:[%s4] sm:$0x3]
    %v203 = vperm.slane %v201, 0
    %v204 = vperm.slane %v201, 1
    %v207 = vadd.f32 %v179, %v203
    %v208 = vadd.f32 %v199, %v204
    %v209 = vmax.f32 %v207, 0.0
    %v210 = vmax.f32 %v208, 0.0
    %v211 = vld [vmem:[#allocation10] sm:$0xff]
    %v212 = vld [vmem:[#allocation10 + $0x8] sm:$0xff]
    %v213 = vld [vmem:[#allocation10 + $0x10] sm:$0xff]
    %v214 = vld [vmem:[#allocation10 + $0x18] sm:$0xff]
    %v215 = vld [vmem:[#allocation10 + $0x20] sm:$0xff]
    %v216 = vld [vmem:[#allocation10 + $0x28] sm:$0xff]
    %v217 = vld [vmem:[#allocation10 + $0x30] sm:$0xff]
    %v218 = vld [vmem:[#allocation10 + $0x38] sm:$0xff]
    %v219 = vld [vmem:[#allocation10 + $0x40] sm:$0xff]
    %v220 = vld [vmem:[#allocation10 + $0x48] sm:$0xff]
    %v221 = vld [vmem:[#allocation10 + $0x50] sm:$0xff]
    %v222 = vld [vmem:[#allocation10 + $0x58] sm:$0xff]
    %v223 = vld [vmem:[#allocation10 + $0x60] sm:$0xff]
    %v224 = vld [vmem:[#allocation10 + $0x68] sm:$0xff]
    %v225 = vld [vmem:[#allocation10 + $0x70] sm:$0xff]
    %v226 = vld [vmem:[#allocation10 + $0x78] sm:$0xff]
    %v227 = vld [vmem:[#allocation10 + $0x80] sm:$0xff]
    %v228 = vld [vmem:[#allocation10 + $0x88] sm:$0xff]
    %v229 = vld [vmem:[#allocation10 + $0x90] sm:$0xff]
    %v230 = vld [vmem:[#allocation10 + $0x98] sm:$0xff]
    %v231 = vld [vmem:[#allocation10 + $0xa0] sm:$0xff]
    %v232 = vld [vmem:[#allocation10 + $0xa8] sm:$0xff]
    %v233 = vld [vmem:[#allocation10 + $0xb0] sm:$0xff]
    %v234 = vld [vmem:[#allocation10 + $0xb8] sm:$0xff]
    %v235 = vld [vmem:[#allocation10 + $0xc0] sm:$0xff]
    %v236 = vld [vmem:[#allocation10 + $0xc8] sm:$0xff]
    %v237 = vld [vmem:[#allocation10 + $0xd0] sm:$0xff]
    %v238 = vld [vmem:[#allocation10 + $0xd8] sm:$0xff]
    %v239 = vld [vmem:[#allocation10 + $0xe0] sm:$0xff]
    %v240 = vld [vmem:[#allocation10 + $0xe8] sm:$0xff]
    %v241 = vld [vmem:[#allocation10 + $0xf0] sm:$0xff]
    %v242 = vld [vmem:[#allocation10 + $0xf8] sm:$0xff]
    %v243 = vld [vmem:[#allocation10 + $0x100] sm:$0xff]
    %v244 = vld [vmem:[#allocation10 + $0x108] sm:$0xff]
    %v245 = vld [vmem:[#allocation10 + $0x110] sm:$0xff]
    %v246 = vld [vmem:[#allocation10 + $0x118] sm:$0xff]
    %v247 = vld [vmem:[#allocation10 + $0x120] sm:$0xff]
    %v248 = vld [vmem:[#allocation10 + $0x128] sm:$0xff]
    %v249 = vld [vmem:[#allocation10 + $0x130] sm:$0xff]
    %v250 = vld [vmem:[#allocation10 + $0x138] sm:$0xff]
    %v251 = vld [vmem:[#allocation10 + $0x140] sm:$0xff]
    %v252 = vld [vmem:[#allocation10 + $0x148] sm:$0xff]
    %v253 = vld [vmem:[#allocation10 + $0x150] sm:$0xff]
    %v254 = vld [vmem:[#allocation10 + $0x158] sm:$0xff]
    %v255 = vld [vmem:[#allocation10 + $0x160] sm:$0xff]
    %v256 = vld [vmem:[#allocation10 + $0x168] sm:$0xff]
    %v257 = vld [vmem:[#allocation10 + $0x170] sm:$0xff]
    %v258 = vld [vmem:[#allocation10 + $0x178] sm:$0xff]
    %v259 = vld [vmem:[#allocation10 + $0x180] sm:$0xff]
    %v260 = vld [vmem:[#allocation10 + $0x188] sm:$0xff]
    %v261 = vld [vmem:[#allocation10 + $0x190] sm:$0xff]
    %v262 = vld [vmem:[#allocation10 + $0x198] sm:$0xff]
    %v263 = vld [vmem:[#allocation10 + $0x1a0] sm:$0xff]
    %v264 = vld [vmem:[#allocation10 + $0x1a8] sm:$0xff]
    %v265 = vld [vmem:[#allocation10 + $0x1b0] sm:$0xff]
    %v266 = vld [vmem:[#allocation10 + $0x1b8] sm:$0xff]
    %v267 = vld [vmem:[#allocation10 + $0x1c0] sm:$0xff]
    %v268 = vld [vmem:[#allocation10 + $0x1c8] sm:$0xff]
    %v269 = vld [vmem:[#allocation10 + $0x1d0] sm:$0xff]
    %v270 = vld [vmem:[#allocation10 + $0x1d8] sm:$0xff]
    %v271 = vld [vmem:[#allocation10 + $0x1e0] sm:$0xff]
    %v272 = vld [vmem:[#allocation10 + $0x1e8] sm:$0xff]
    %v273 = vld [vmem:[#allocation10 + $0x1f0] sm:$0xff]
    %v274 = vld [vmem:[#allocation10 + $0x1f8] sm:$0xff]
    %v275 = vld [vmem:[%s6] sm:$0x3]
    %v277 = vperm.slane %v275, 0
    %v278 = vperm.slane %v275, 1
    %281 = vmatpush.msra.mxu0 %v241
    %282 = vmatpush.msra.mxu0 %v239
    %283 = vmatpush.msra.mxu0 %v237
    %284 = vmatpush.msra.mxu0 %v235
    %285 = vmatpush.msra.mxu0 %v233
    %286 = vmatpush.msra.mxu0 %v231
    %287 = vmatpush.msra.mxu0 %v229
    %288 = vmatpush.msra.mxu0 %v227
    %289 = vmatpush.msra.mxu0 %v225
    %290 = vmatpush.msra.mxu0 %v223
    %291 = vmatpush.msra.mxu0 %v221
    %292 = vmatpush.msra.mxu0 %v219
    %293 = vmatpush.msra.mxu0 %v217
    %294 = vmatpush.msra.mxu0 %v215
    %295 = vmatpush.msra.mxu0 %v213
    %296 = vmatpush.msra.mxu0 %v211
    %297 = vmatmul.f32.gmra.mxu0 %v209
    %v298 = vpop.f32.mrf.mxu0
    %v299 = vadd.f32 %v277, %v298
    %300 = vdwg.mxu0
    %301 = vmatpush.msra.mxu0 %v273
    %302 = vmatpush.msra.mxu0 %v271
    %303 = vmatpush.msra.mxu0 %v269
    %304 = vmatpush.msra.mxu0 %v267
    %305 = vmatpush.msra.mxu0 %v265
    %306 = vmatpush.msra.mxu0 %v263
    %307 = vmatpush.msra.mxu0 %v261
    %308 = vmatpush.msra.mxu0 %v259
    %309 = vmatpush.msra.mxu0 %v257
    %310 = vmatpush.msra.mxu0 %v255
    %311 = vmatpush.msra.mxu0 %v253
    %312 = vmatpush.msra.mxu0 %v251
    %313 = vmatpush.msra.mxu0 %v249
    %314 = vmatpush.msra.mxu0 %v247
    %315 = vmatpush.msra.mxu0 %v245
    %316 = vmatpush.msra.mxu0 %v243
    %317 = vmatmul.f32.gmra.mxu0 %v210
    %v318 = vpop.f32.mrf.mxu0
    %v319 = vadd.f32 %v299, %v318
    %320 = vdwg.mxu0
    %321 = vmatpush.msra.mxu0 %v242
    %322 = vmatpush.msra.mxu0 %v240
    %323 = vmatpush.msra.mxu0 %v238
    %324 = vmatpush.msra.mxu0 %v236
    %325 = vmatpush.msra.mxu0 %v234
    %326 = vmatpush.msra.mxu0 %v232
    %327 = vmatpush.msra.mxu0 %v230
    %328 = vmatpush.msra.mxu0 %v228
    %329 = vmatpush.msra.mxu0 %v226
    %330 = vmatpush.msra.mxu0 %v224
    %331 = vmatpush.msra.mxu0 %v222
    %332 = vmatpush.msra.mxu0 %v220
    %333 = vmatpush.msra.mxu0 %v218
    %334 = vmatpush.msra.mxu0 %v216
    %335 = vmatpush.msra.mxu0 %v214
    %336 = vmatpush.msra.mxu0 %v212
    %337 = vmatmul.f32.gmra.mxu0 %v209
    %v338 = vpop.f32.mrf.mxu0
    %v339 = vadd.f32 %v278, %v338
    %340 = vdwg.mxu0
    %341 = vmatpush.msra.mxu0 %v274
    %342 = vmatpush.msra.mxu0 %v272
    %343 = vmatpush.msra.mxu0 %v270
    %344 = vmatpush.msra.mxu0 %v268
    %345 = vmatpush.msra.mxu0 %v266
    %346 = vmatpush.msra.mxu0 %v264
    %347 = vmatpush.msra.mxu0 %v262
    %348 = vmatpush.msra.mxu0 %v260
    %349 = vmatpush.msra.mxu0 %v258
    %350 = vmatpush.msra.mxu0 %v256
    %351 = vmatpush.msra.mxu0 %v254
    %352 = vmatpush.msra.mxu0 %v252
    %353 = vmatpush.msra.mxu0 %v250
    %354 = vmatpush.msra.mxu0 %v248
    %355 = vmatpush.msra.mxu0 %v246
    %356 = vmatpush.msra.mxu0 %v244
    %357 = vmatmul.f32.gmra.mxu0 %v210
    %v358 = vpop.f32.mrf.mxu0
    %v359 = vadd.f32 %v339, %v358
    %360 = vdwg.mxu0
    %v361 = vmax.f32 %v319, 0.0
    %v362 = vmax.f32 %v359, 0.0
    %v363 = vld [vmem:[%s7] sm:$0x3]
    %v365 = vperm.slane %v363, 0
    %v366 = vperm.slane %v363, 1
    %v369 = vmul.f32 %v361, %v365
    %v370 = vmul.f32 %v362, %v366
    %v371 = vadd.f32 %v369, %v370
    %372 = vadd.xlane.f32.xlu0 %v371
    %v373 = vpop.xlane.xlu0 %372
    %s374 = sld [smem:[#allocation2]]
    %v375 = vstv %s374
    %v376 = vadd.f32 %v373, %v375
    %vm377 = vcmask 7168
    %378 = vst.msk [vmem:[%s9] sm:$0xff] %vm377, %v376
    // Predicated region
    $region58: #{tpu_custom_call.1} parent=1 // pred_check
      _
    $region59: #{tpu_custom_call.1} parent=1 // pred_check_branch
      %380 = sbr.rel (0) target = $region61
    $region60: #{tpu_custom_call.1} parent=1 // pred_region
      _
    $region61: #{tpu_custom_call.1} parent=1 // pred_fallthru
      _
    // Predicated region
    $region62: #{tpu_custom_call.1} parent=1 // pred_check
      _
    $region63: #{tpu_custom_call.1} parent=1 // pred_check_branch
      %382 = sbr.rel (0) target = $region65
    $region64: #{tpu_custom_call.1} parent=1 // pred_region
      _
    $region65: #{tpu_custom_call.1} parent=1 // pred_fallthru
      _
    %383 = vsyncpa [#allocation4], 1
    %384 = vsyncpa [#allocation6], 1
    %385 = vsyncpa [#allocation9], 1

</llo_original>
